<compile_context>
chip_gen: v5e
topology: v5e:2x2
jax: 0.10.0
libtpu: 0.0.40
codegen_flags: <defaults>
</compile_context>

<pallas_src>
import math

import jax
import jax.numpy as jnp
from jax import lax
from jax.experimental import pallas as pl
from jax.experimental.pallas import tpu as pltpu

_VMEM_LIMIT_BYTES = 32 * 1024 * 1024   # safe scoped limit on v5e/v6e/v7x
_TILE_BUDGET_BYTES = 24 * 1024 * 1024  # x/out double-buffers must fit in this


def _projection_kernel(x_ref, w_ref, o_ref):
    # x_ref: (TM, IN)   w_ref: (OUT, IN)   o_ref: (TM, OUT)
    # trans_b contraction: out[m, o] = sum_k x[m, k] * w[o, k]   (== x @ W.T)
    o_ref[...] = lax.dot_general(
        x_ref[...],
        w_ref[...],
        dimension_numbers=(((1,), (1,)), ((), ())),
        preferred_element_type=jnp.float32,
    ).astype(o_ref.dtype)


def _choose_tm(m_eff, in_dim, out_dim, dtype_bytes, tm_cap):
    """Pick the row-tile so double-buffered x + out blocks fit the tile budget."""
    per_row_bytes = 2 * (in_dim + out_dim) * dtype_bytes  # 2x for double buffering
    tm_budget = max(_TILE_BUDGET_BYTES // per_row_bytes, 32)
    tm = min(tm_cap, tm_budget)
    if tm >= m_eff:
        return m_eff  # single full-extent block: always layout-legal
    if tm >= 512:
        tm = (tm // 512) * 512   # multiple of 256/512 -> fine for any dtype & MXU
    else:
        tm = max(32, (tm // 32) * 32)  # sublane-legal for any dtype
    return tm


def sequential_projection(x, weight, *, tm_cap=8192):
    """x: (..., seq_in_len), weight: (seq_out_len, seq_in_len) as in nn.Linear."""
    seq_out, seq_in = weight.shape
    assert x.shape[-1] == seq_in
    lead = x.shape[:-1]
    m = math.prod(lead) if lead else 1

    if m == 0:
        return jnp.zeros(lead + (seq_out,), dtype=x.dtype)

    # --- lane-dense row folding (free, contiguous reshapes) -------------------
    g = 1
    if seq_in < 128:
        g_target = -(-128 // seq_in)  # ceil(128 / seq_in)
        if g_target > 1 and m % g_target == 0:
            g = g_target

    if g > 1:
        m_eff = m // g
        in_dim = g * seq_in
        out_dim = g * seq_out
        x2d = x.reshape(m_eff, in_dim)
        # Block-diagonal weight: y_fold = x_fold @ kron(I_g, W).T reproduces the
        # per-row projection exactly (built once; tiny: (g*out, g*in)).
        w_eff = jnp.kron(jnp.eye(g, dtype=weight.dtype), weight)
    else:
        m_eff = m
        in_dim = seq_in
        out_dim = seq_out
        x2d = x.reshape(m_eff, in_dim)
        w_eff = weight

    dtype_bytes = jnp.dtype(x.dtype).itemsize
    tm = _choose_tm(m_eff, in_dim, out_dim, dtype_bytes, tm_cap)
    grid = (pl.cdiv(m_eff, tm),)  # ragged last tile handled by Pallas, no pad

    out2d = pl.pallas_call(
        _projection_kernel,
        out_shape=jax.ShapeDtypeStruct((m_eff, out_dim), x.dtype),
        grid_spec=pltpu.PrefetchScalarGridSpec(
            num_scalar_prefetch=0,
            grid=grid,
            in_specs=[
                # x: tiled over M, full (folded) feature width per tile.
                pl.BlockSpec((tm, in_dim), lambda i: (i, 0)),
                # weight: constant block index -> DMA'd once, VMEM-resident.
                pl.BlockSpec((out_dim, in_dim), lambda i: (0, 0)),
            ],
            out_specs=pl.BlockSpec((tm, out_dim), lambda i: (i, 0)),
        ),
        compiler_params=pltpu.CompilerParams(
            dimension_semantics=("parallel",),
            vmem_limit_bytes=_VMEM_LIMIT_BYTES,
        ),
    )(x2d, w_eff)

    # Unfold rows (contiguous reshape, free) and restore leading dims.
    return out2d.reshape(*lead, seq_out)


if __name__ == "__main__":
    # Small shapes consistent with the module's forward: Linear over last dim.
    batch, channels = 2, 4
    seq_in_len, seq_out_len = 16, 8

    key = jax.random.PRNGKey(0)
    kx, kw = jax.random.split(key)

    x = jax.random.normal(kx, (batch, channels, seq_in_len), dtype=jnp.float32)
    # Deterministic parameter init (nn.Linear weight shape: (out, in)).
    weight = jax.random.normal(
        kw, (seq_out_len, seq_in_len), dtype=jnp.float32
    ) * (1.0 / jnp.sqrt(seq_in_len))

    y = sequential_projection(x, weight)
    jax.block_until_ready(y)

    y_ref = jnp.einsum("bcl,ol->bco", x, weight)
    assert y.shape == (batch, channels, seq_out_len)
    assert jnp.allclose(y, y_ref, atol=1e-5, rtol=1e-5)

    # Larger M: folded, single large lane-dense block.
    xb = jax.random.normal(key, (16, 80, seq_in_len), dtype=jnp.float32)
    yb = sequential_projection(xb, weight)
    jax.block_until_ready(yb)
    yb_ref = jnp.einsum("bcl,ol->bco", xb, weight)
    assert jnp.allclose(yb, yb_ref, atol=1e-5, rtol=1e-5)

    # Force a multi-step grid with a ragged last tile (no wrapper pad/slice).
    yc = sequential_projection(xb, weight, tm_cap=64)
    jax.block_until_ready(yc)
    assert jnp.allclose(yc, yb_ref, atol=1e-5, rtol=1e-5)

    # Fallback (unfolded) path: M not divisible by the fold factor g.
    xd = jax.random.normal(kx, (3, 5, seq_in_len), dtype=jnp.float32)
    yd = sequential_projection(xd, weight)
    jax.block_until_ready(yd)
    yd_ref = jnp.einsum("bcl,ol->bco", xd, weight)
    assert jnp.allclose(yd, yd_ref, atol=1e-5, rtol=1e-5)

    print("KERNEL_OK")
</pallas_src>

<mosaic_0001>
module attributes {stable_mosaic.version = 11 : i64} {
  func.func @_projection_kernel(%arg0: i32, %arg1: memref<1x128xf32, #tpu.memory_space<vmem>>, %arg2: memref<64x128xf32, #tpu.memory_space<vmem>>, %arg3: memref<1x64xf32, #tpu.memory_space<vmem>>) attributes {dimension_semantics = [#tpu.dimension_semantics<parallel>], iteration_bounds = array<i64: 1>, scalar_prefetch = 0 : i64, scratch_operands = 0 : i64, tpu.core_type = #tpu.core_type<tc>, window_params = [{transform_indices = @transform_0, window_bounds = array<i64: 1, 128>}, {pipeline_mode = #tpu.pipeline_mode<synchronous>, transform_indices = @transform_1, window_bounds = array<i64: 64, 128>}, {transform_indices = @transform_2, window_bounds = array<i64: 1, 64>}]} {
    %c0 = arith.constant 0 : index
    %c0_0 = arith.constant 0 : index
    %0 = vector.load %arg1[%c0, %c0_0] : memref<1x128xf32, #tpu.memory_space<vmem>>, vector<1x128xf32>
    %c0_1 = arith.constant 0 : index
    %c0_2 = arith.constant 0 : index
    %1 = vector.load %arg2[%c0_1, %c0_2] : memref<64x128xf32, #tpu.memory_space<vmem>>, vector<64x128xf32>
    %cst = arith.constant dense<0.000000e+00> : vector<1x64xf32>
    %2 = tpu.matmul %0, %1, %cst {dimension_numbers = #tpu.dot_dimension_numbers<[1], [1], [0], [0], [0, 0, 1, 0], [], []>} : vector<1x128xf32>, vector<64x128xf32>, vector<1x64xf32> -> vector<1x64xf32>
    %c0_3 = arith.constant 0 : index
    %c0_4 = arith.constant 0 : index
    %3 = vector.load %arg3[%c0_3, %c0_4] : memref<1x64xf32, #tpu.memory_space<vmem>>, vector<1x64xf32>
    tpu.vector_store %arg3[%c0_3, %c0_4], %2 {strides = array<i32>} : memref<1x64xf32, #tpu.memory_space<vmem>>, vector<1x64xf32>,
    return
  }
  func.func @transform_0(%arg0: i32) -> (i32, i32) {
    %c0_i32 = arith.constant 0 : i32
    %c0_i32_0 = arith.constant 0 : i32
    return %arg0, %c0_i32 : i32, i32
  }
  func.func @transform_1(%arg0: i32) -> (i32, i32) {
    %c0_i32 = arith.constant 0 : i32
    %c0_i32_0 = arith.constant 0 : i32
    %c0_i32_1 = arith.constant 0 : i32
    return %c0_i32, %c0_i32_0 : i32, i32
  }
  func.func @transform_2(%arg0: i32) -> (i32, i32) {
    %c0_i32 = arith.constant 0 : i32
    %c0_i32_0 = arith.constant 0 : i32
    return %arg0, %c0_i32 : i32, i32
  }
}

</mosaic_0001>

<llo_original>
// kernel: tpu_custom_call.1
$region0: #{tpu_custom_call.1}
  #allocation0 [shape = 'u32[]', space=smem, size = 0x4, offset = 0x4, fixed_abs, tag = 'smem constant byte address 0x4 - core index']
  #allocation1 [shape = 'u32[72,128]{1,0:T(1,128)}', space=vmem, size = 0x9000, scoped, tag = 'internal scratch']
  %s0 = inlined_call_operand.hbm [shape: f32[1,128], index: 0, kind: input, shape index: {}]
  %s1 = inlined_call_operand.hbm [shape: f32[64,128], index: 1, kind: input, shape index: {}]
  %s2 = inlined_call_operand.hbm [shape: f32[1,64], index: 2, kind: output, shape index: {}]
  %s3 = sld [smem:[#allocation0]]
  $region26: #{tpu_custom_call.1} parent=0
    _
  %s5 = ssub.s32 1, %s3
  %s6 = scalar_select 0, %s5, %s3
  $region1: #{tpu_custom_call.1} parent=0
    #allocation2 [shape = 'u8[512]{0}', space=vmem, size = 0x400, scoped, tag = 'input window, operand 0, single buffered']
    #allocation3 [shape = 's32[1]{0}', space=sflag, size = 0x4, scoped, tag = 'scoped memory for tpu_custom_call.1']
    #allocation4 [shape = 's32[1]{0}', space=sflag, size = 0x4, scoped, tag = 'scoped memory for tpu_custom_call.1']
    #allocation5 [shape = 'u8[32768]{0}', space=vmem, size = 0x8000, scoped, tag = 'input window, operand 1, single buffered']
    #allocation6 [shape = 's32[1]{0}', space=sflag, size = 0x4, scoped, tag = 'scoped memory for tpu_custom_call.1']
    #allocation7 [shape = 'u8[512]{0}', space=vmem, size = 0x400, scoped, tag = 'output window, operand 0, single buffered']
    %7 = vsyncpa [#allocation3], 0
    %8 = vsyncpa [#allocation6], 0
    %9 = vsyncpa [#allocation4], 0
    // Predicated region
    $region2: #{tpu_custom_call.1} parent=1 // pred_check
      _
    $region3: #{tpu_custom_call.1} parent=1 // pred_check_branch
      %11 = sbr.rel (0) target = $region5
    $region4: #{tpu_custom_call.1} parent=1 // pred_region
      %13 = vsyncadd [#allocation3], 0
      %s15 = sshll.u32 %s0, 4
      %s16 = int_to_ptr.hbm [resolvable:$true] %s15
      %s17 = sshll.u32 [#allocation2], 4
      %s18 = int_to_ptr.vmem [resolvable:$true] %s17
      %20 = dma.hbm_to_vmem [thread:$0]  %s16, 16, %s18, [#allocation3]
    $region5: #{tpu_custom_call.1} parent=1 // pred_fallthru
      _
    // Predicated region
    $region6: #{tpu_custom_call.1} parent=1 // pred_check
      _
    $region7: #{tpu_custom_call.1} parent=1 // pred_check_branch
      %22 = sbr.rel (0) target = $region9
    $region8: #{tpu_custom_call.1} parent=1 // pred_region
      %24 = vsyncadd [#allocation6], 0
      %s25 = sshll.u32 %s1, 4
      %s26 = int_to_ptr.hbm [resolvable:$true] %s25
      %s27 = sshll.u32 [#allocation5], 4
      %s28 = int_to_ptr.vmem [resolvable:$true] %s27
      %33 = dma.hbm_to_vmem [thread:$0]  %s26, 1024, %s28, [#allocation6], 128, 128, 8
    $region9: #{tpu_custom_call.1} parent=1 // pred_fallthru
      _
    // Predicated region
    $region10: #{tpu_custom_call.1} parent=1 // pred_check
      _
    $region11: #{tpu_custom_call.1} parent=1 // pred_check_branch
      %35 = sbr.rel (0) target = $region13
    $region12: #{tpu_custom_call.1} parent=1 // pred_region
      %37 = dma.done [#allocation3], 16
    $region13: #{tpu_custom_call.1} parent=1 // pred_fallthru
      _
    // Predicated region
    $region14: #{tpu_custom_call.1} parent=1 // pred_check
      _
    $region15: #{tpu_custom_call.1} parent=1 // pred_check_branch
      %39 = sbr.rel (0) target = $region17
    $region16: #{tpu_custom_call.1} parent=1 // pred_region
      %41 = dma.done [#allocation6], 1024
    $region17: #{tpu_custom_call.1} parent=1 // pred_fallthru
      _
    %v42 = vld [vmem:[#allocation2] sm:$0x1]
    %v43 = vld [vmem:[#allocation5] sm:$0xff]
    %v44 = vld [vmem:[#allocation5 + $0x8] sm:$0xff]
    %v45 = vld [vmem:[#allocation5 + $0x10] sm:$0xff]
    %v46 = vld [vmem:[#allocation5 + $0x18] sm:$0xff]
    %v47 = vld [vmem:[#allocation5 + $0x20] sm:$0xff]
    %v48 = vld [vmem:[#allocation5 + $0x28] sm:$0xff]
    %v49 = vld [vmem:[#allocation5 + $0x30] sm:$0xff]
    %v50 = vld [vmem:[#allocation5 + $0x38] sm:$0xff]
    %51 = vmatpush.xpose.msra.mxu0 0.0
    %52 = vmatpush.xpose.msra.mxu0 0.0
    %53 = vmatpush.xpose.msra.mxu0 0.0
    %54 = vmatpush.xpose.msra.mxu0 0.0
    %55 = vmatpush.xpose.msra.mxu0 0.0
    %56 = vmatpush.xpose.msra.mxu0 0.0
    %57 = vmatpush.xpose.msra.mxu0 0.0
    %58 = vmatpush.xpose.msra.mxu0 0.0
    %59 = vmatpush.xpose.msra.mxu0 %v50
    %60 = vmatpush.xpose.msra.mxu0 %v49
    %61 = vmatpush.xpose.msra.mxu0 %v48
    %62 = vmatpush.xpose.msra.mxu0 %v47
    %63 = vmatpush.xpose.msra.mxu0 %v46
    %64 = vmatpush.xpose.msra.mxu0 %v45
    %65 = vmatpush.xpose.msra.mxu0 %v44
    %66 = vmatpush.xpose.msra.mxu0 %v43
    %67 = vmatmul.f32.gmra.mxu0 %v42
    %v68 = vpop.f32.mrf.mxu0
    %v69 = vadd.f32 0.0, %v68
    %70 = vdwg.mxu0
    %vm71 = vcmask 516096
    %72 = vst.msk [vmem:[#allocation7] sm:$0x1] %vm71, %v69
    // Predicated region
    $region18: #{tpu_custom_call.1} parent=1 // pred_check
      _
    $region19: #{tpu_custom_call.1} parent=1 // pred_check_branch
      %74 = sbr.rel (0) target = $region21
    $region20: #{tpu_custom_call.1} parent=1 // pred_region
      %76 = vsyncadd [#allocation4], 0
      %s78 = sshll.u32 [#allocation7], 4
      %s79 = int_to_ptr.vmem [resolvable:$true] %s78
      %s80 = sshll.u32 %s2, 4
      %s81 = int_to_ptr.hbm [resolvable:$true] %s80
      %83 = dma.vmem_to_hbm [thread:$0]  %s79, 16, %s81, [#allocation4]
    $region21: #{tpu_custom_call.1} parent=1 // pred_fallthru
      _
    // Predicated region
    $region22: #{tpu_custom_call.1} parent=1 // pred_check
      _
    $region23: #{tpu_custom_call.1} parent=1 // pred_check_branch
      %85 = sbr.rel (0) target = $region25
    $region24: #{tpu_custom_call.1} parent=1 // pred_region
      %87 = dma.done [#allocation4], 16
    $region25: #{tpu_custom_call.1} parent=1 // pred_fallthru
      _
    %88 = vsyncpa [#allocation3], 1
    %89 = vsyncpa [#allocation6], 1
    %90 = vsyncpa [#allocation4], 1

</llo_original>
